<compile_context>
chip_gen: v7x
topology: tpu7x:2x2x1
jax: 0.10.0
libtpu: 0.0.40
codegen_flags: <defaults>
</compile_context>

<pallas_src>
import math

import jax
import jax.numpy as jnp
import numpy as np
from jax.experimental import pallas as pl
from jax.experimental.pallas import tpu as pltpu


# ----------------------------------------------------------------------------
# Pallas kernel factory: one balanced SinkhornLoss.forward() per grid step
# ----------------------------------------------------------------------------
def _make_sinkhorn_kernel(eps, logZ, n1, n2, d, n_iter, atol, rtol, thresh):
    eps = float(eps)
    logZ = float(logZ)
    atol = float(atol)
    rtol = float(rtol)
    thresh = float(thresh)
    n_iter = int(n_iter)
    inv_eps = 1.0 / eps
    xw_c = 1.0 / n1                    # uniform source weight
    yw_c = 1.0 / n2                    # uniform target weight (== max|y_w|)
    log_xw = -math.log(n1)
    log_yw = -math.log(n2)
    logZ2 = logZ + math.log(n1 * n2)   # logZ with x_w*y_w folded in

    def kernel(xs_ref, ys_t_ref, out_ref,
               u_ref, v_ref, a_ref, b_ref, K_ref, KTu_ref, done_ref):
        # Points are pre-scaled by sqrt(1/(2*scale^2)) in the wrapper, so the
        # plain squared distance already equals C = ||x-y||^2 / (2*scale^2).
        xs = xs_ref[0]                     # (N1, d)
        ys_t = ys_t_ref[0]                 # (d, N2)

        # --- cost matrix -------------------------------------------------------
        if d <= 4:
            # tiny feature dim: pure-VPU broadcast-subtract-square (skip MXU)
            C = None
            for k in range(d):
                diff = xs[:, k:k + 1] - ys_t[k:k + 1, :]        # (N1, N2)
                sq = diff * diff
                C = sq if C is None else C + sq
        else:
            x2 = jnp.sum(xs * xs, axis=1, keepdims=True)        # (N1, 1)
            y2 = jnp.sum(ys_t * ys_t, axis=0, keepdims=True)    # (1, N2)
            # bf16 operands feed the MXU at native rate; accumulate in f32.
            xy = jnp.dot(xs.astype(jnp.bfloat16), ys_t.astype(jnp.bfloat16),
                         preferred_element_type=jnp.float32)
            # NOTE: the torch reference (cdist**2) has no clamp; max(., 0) only
            # guards fp cancellation — deliberate, benign divergence.
            C = jnp.maximum(x2 + y2 - 2.0 * xy, 0.0)

        # --- init Sinkhorn state (scratch, re-initialized each grid step) ------
        # C is dead after this point: only K stays resident in VMEM.
        K0 = jnp.exp(-C * inv_eps - logZ2)                      # weights folded
        u_ref[...] = jnp.ones((n1, 1), jnp.float32)
        v_ref[...] = jnp.ones((1, n2), jnp.float32)
        a_ref[...] = jnp.zeros((n1, 1), jnp.float32)
        b_ref[...] = jnp.zeros((1, n2), jnp.float32)
        K_ref[...] = K0
        KTu_ref[...] = jnp.sum(K0, axis=0, keepdims=True)       # u0 == 1
        done_ref[0] = jnp.int32(0)

        # --- Sinkhorn iterations: early exit + gated log-domain absorption -----
        @pl.loop(0, n_iter)
        def _(_it):
            @pl.when(done_ref[0] == 0)
            def _():
                K = K_ref[...]
                v_new = yw_c / KTu_ref[...]                               # (1,N2)
                u_new = xw_c / jnp.sum(K * v_new, axis=1, keepdims=True)  # (N1,1)
                KTu_new = jnp.sum(K * u_new, axis=0, keepdims=True)       # (1,N2)

                u_ref[...] = u_new
                v_ref[...] = v_new
                KTu_ref[...] = KTu_new            # reused by next iter + epilogue

                err = jnp.max(jnp.abs(v_new * KTu_new - yw_c))
                conv = jnp.logical_or(err < atol, err < rtol * yw_c)
                done_ref[0] = conv.astype(jnp.int32)

                # u_new, v_new > 0 by construction (balanced case): no abs.
                uv_inf = jnp.maximum(jnp.max(u_new), jnp.max(v_new))
                blow = jnp.logical_and(jnp.logical_not(conv), uv_inf > thresh)

                @pl.when(blow)                    # rare blow-up absorption
                def _():
                    # Exact identity: K(a - eps*log u, b - eps*log v)
                    #               = K(a, b) * u * v   -> no exp, no C needed.
                    a_ref[...] = a_ref[...] - eps * jnp.log(u_new)
                    b_ref[...] = b_ref[...] - eps * jnp.log(v_new)
                    u_ref[...] = jnp.ones((n1, 1), jnp.float32)
                    v_ref[...] = jnp.ones((1, n2), jnp.float32)
                    K_new = K * u_new * v_new
                    K_ref[...] = K_new
                    KTu_ref[...] = jnp.sum(K_new, axis=0, keepdims=True)  # u == 1

        # --- dual objective (balanced case), algebraic epilogue ----------------
        # With folded-weight K_ij = exp(-(C_ij + a_i + b_j)/eps - logZ)*x_w*y_w:
        #   f_cts_i = a_i + eps*(log (K v)_i   - log x_w)
        #   g_cts_j = b_j + eps*(log (K^T u)_j - log y_w)
        #   term3   = eps * sum_ij K_ij * (x_w/(Kv)_i) * (y_w/(K^Tu)_j)
        # Exact for any state (u, v, a, b, K), including right after absorption.
        K = K_ref[...]
        a = a_ref[...]
        b = b_ref[...]
        Kv = jnp.sum(K * v_ref[...], axis=1, keepdims=True)     # (N1, 1)
        KTu = KTu_ref[...]                                      # (1, N2) carried

        f_cts = a + eps * (jnp.log(Kv) - log_xw)                # (N1, 1)
        g_cts = b + eps * (jnp.log(KTu) - log_yw)               # (1, N2)

        f1 = jnp.sum(f_cts, keepdims=True) * xw_c               # (1, 1)
        f2 = jnp.sum(g_cts, keepdims=True) * yw_c               # (1, 1)
        t3 = jnp.sum(K * (1.0 / Kv) * (1.0 / KTu), keepdims=True) \
            * (eps * xw_c * yw_c)                               # (1, 1)

        out_ref[...] = (-(f1 + f2 + t3)).reshape(1, 1, 1)

    return kernel


# ----------------------------------------------------------------------------
# Batched wrapper: one pallas_call for P independent Sinkhorn pairs
# ----------------------------------------------------------------------------
def sinkhorn_losses_batched(xs, ys, inv_two_scale_sq, eps, n_iter,
                            atol=1e-4, rtol=1e-4, thresh=100.0):
    """Balanced SinkhornLoss.forward() for a batch of point-cloud pairs.

    xs: (P, N1, d), ys: (P, N2, d), inv_two_scale_sq: (P,) = 1/(2*scale^2).
    Returns (P,) losses.
    """
    xs = jnp.asarray(xs, jnp.float32)
    ys = jnp.asarray(ys, jnp.float32)
    P, n1, d = xs.shape
    n2 = ys.shape[1]

    # Fold the per-pair cost scale into the points (O(P*N*d)); removes the
    # full-matrix `C *= s` pass and the scalar kernel input entirely.
    root = jnp.sqrt(jnp.asarray(inv_two_scale_sq, jnp.float32)).reshape(P, 1, 1)
    xs = xs * root
    ys_t = jnp.transpose(ys * root, (0, 2, 1))                  # (P, d, N2)

    logZ = math.log((2.0 * math.pi * float(eps)) ** (d / 2.0))
    kernel = _make_sinkhorn_kernel(eps, logZ, n1, n2, d, n_iter,
                                   atol, rtol, thresh)

    # VMEM budget: resident K + init/epilogue temporaries + double-buffered
    # input blocks + small vectors, with headroom; clamp to v7x's 64 MiB.
    est = (3 * 4 * n1 * n2                    # K + transient (N1,N2) temporaries
           + 4 * 4 * d * (n1 + n2)            # double-buffered point blocks
           + 16 * 4 * (n1 + n2)               # u/v/a/b/KTu vectors
           + (4 << 20))                       # headroom
    vmem_limit = int(min(64 << 20, max(32 << 20, est)))

    out = pl.pallas_call(
        kernel,
        out_shape=jax.ShapeDtypeStruct((P, 1, 1), jnp.float32),
        grid_spec=pltpu.PrefetchScalarGridSpec(
            num_scalar_prefetch=0,
            grid=(P,),
            in_specs=[
                pl.BlockSpec((1, n1, d), lambda p: (p, 0, 0)),   # x points (scaled)
                pl.BlockSpec((1, d, n2), lambda p: (p, 0, 0)),   # y points (scaled, T)
            ],
            out_specs=pl.BlockSpec((1, 1, 1), lambda p: (p, 0, 0)),
            scratch_shapes=[
                pltpu.VMEM((n1, 1), jnp.float32),    # u
                pltpu.VMEM((1, n2), jnp.float32),    # v
                pltpu.VMEM((n1, 1), jnp.float32),    # a (absorbed dual)
                pltpu.VMEM((1, n2), jnp.float32),    # b (absorbed dual)
                pltpu.VMEM((n1, n2), jnp.float32),   # K (only resident NxN buffer)
                pltpu.VMEM((1, n2), jnp.float32),    # K^T u carried across iters
                pltpu.SMEM((1,), jnp.int32),         # early-stop flag
            ],
        ),
        compiler_params=pltpu.CompilerParams(
            dimension_semantics=("parallel",),       # v7x: pairs split across 2 TCs
            vmem_limit_bytes=vmem_limit),
    )(xs, ys_t)
    return out[:, 0, 0]


# ----------------------------------------------------------------------------
# PathsLoss_chain.forward()
# ----------------------------------------------------------------------------
def paths_loss_chain_forward(x, tia, M, tau, chain, sinkhorn_iters,
                             scale_factors, lamda_unbal=None):
    # TODO(synk): unbalanced proxdiv / KL* dual (lamda_unbal is not None) not
    # implemented in the kernel; the module default (lamda_unbal=None) is.
    assert lamda_unbal is None
    del M  # uniform weights 1/N are folded into kernel constants
    T = len(x) // 2
    eps = tau / chain
    pairs = [(x[2 * i - 1], x[2 * i], float(scale_factors[2 * i - 1]))
             for i in range(1, T) if tia[2 * i]]
    if not pairs:
        return jnp.zeros((), jnp.float32)

    # Batch all same-shape pairs into one grid-parallel launch (on v7x prefer
    # groups with an even number of pairs so neither TensorCore idles); a
    # ragged chain falls back to one launch per distinct (N1, N2, d) group.
    groups = {}
    for p in pairs:
        groups.setdefault((tuple(p[0].shape), tuple(p[1].shape)), []).append(p)

    total = jnp.zeros((), jnp.float32)
    for group in groups.values():
        xs = jnp.stack([jnp.asarray(a, jnp.float32) for a, _, _ in group])
        ys = jnp.stack([jnp.asarray(b, jnp.float32) for _, b, _ in group])
        s = jnp.asarray([1.0 / (2.0 * sc * sc) for _, _, sc in group],
                        jnp.float32)
        total = total + jnp.sum(
            sinkhorn_losses_batched(xs, ys, s, eps, sinkhorn_iters))
    return total * chain


# ----------------------------------------------------------------------------
# Pure-numpy reference (mirrors the PyTorch code, float64)
# ----------------------------------------------------------------------------
def _lse(z, axis):
    m = np.max(z, axis=axis, keepdims=True)
    return np.squeeze(m + np.log(np.sum(np.exp(z - m), axis=axis, keepdims=True)),
                      axis=axis)


def sinkhorn_loss_ref(x_spt, y_spt, eps, n_iter, scale,
                      atol=1e-4, rtol=1e-4, thresh=100.0):
    xs = np.asarray(x_spt, np.float64)
    ys = np.asarray(y_spt, np.float64)
    n1, d = xs.shape
    n2 = ys.shape[0]
    xw = np.full((n1,), 1.0 / n1)
    yw = np.full((n2,), 1.0 / n2)
    logZ = math.log((2.0 * math.pi * eps) ** (d / 2.0))
    C = ((xs[:, None, :] - ys[None, :, :]) ** 2).sum(-1) / (2.0 * scale ** 2)

    def getK(a, b):
        return np.exp(-(C + a[:, None] + b[None, :]) / eps - logZ) \
            * xw[:, None] * yw[None, :]

    u = np.ones(n1); v = np.ones(n2)
    a = np.zeros(n1); b = np.zeros(n2)
    K = getK(a, b)
    for _ in range(n_iter):
        v = yw / (K.T @ u)
        u = xw / (K @ v)
        err = np.max(np.abs(v * (K.T @ u) - yw))
        if err < atol or err / np.max(np.abs(yw)) < rtol:
            break
        if max(np.max(np.abs(u)), np.max(np.abs(v))) > thresh:
            a = a - eps * np.log(u)
            b = b - eps * np.log(v)
            u = np.ones(n1); v = np.ones(n2)
            K = getK(a, b)

    f = -eps * np.log(u) + a
    g = -eps * np.log(v) + b
    f_cts = eps * _lse((-C - g[None, :]) / eps + np.log(yw)[None, :], axis=1) - eps * logZ
    g_cts = eps * _lse((-C - f[:, None]) / eps + np.log(xw)[:, None], axis=0) - eps * logZ
    f1 = f_cts @ xw
    f2 = g_cts @ yw
    term3 = eps * np.sum(np.exp(-(C + f_cts[:, None] + g_cts[None, :]) / eps - logZ)
                         * xw[:, None] * yw[None, :])
    return -f1 - f2 - term3


# ----------------------------------------------------------------------------
if __name__ == "__main__":
    key = jax.random.PRNGKey(0)

    # Small, module-consistent setup: chain of 2T snapshots, 8 points each in 2D.
    T = 3
    d = 2
    N = [8] * (2 * T)
    tia = [True] * (2 * T)
    tau = 1.0
    chain = 2.0          # self.tmp; eps = tau / chain
    sinkhorn_iters = 50
    scale_factors = [1.0] * (2 * T)

    keys = jax.random.split(key, 2 * T)
    x = [jax.random.normal(keys[j], (N[j], d), dtype=jnp.float32)
         for j in range(2 * T)]

    out = paths_loss_chain_forward(x, tia, N, tau, chain,
                                   sinkhorn_iters, scale_factors)
    out = jax.block_until_ready(out)

    # Verify against the numpy reference of the PyTorch module.
    eps = tau / chain
    ref = 0.0
    for i in range(1, T):
        if tia[2 * i]:
            ref += sinkhorn_loss_ref(np.asarray(x[2 * i - 1]),
                                     np.asarray(x[2 * i]),
                                     eps, sinkhorn_iters,
                                     scale_factors[2 * i - 1]) * chain
    assert np.allclose(float(out), ref, atol=2e-3, rtol=2e-2), (float(out), ref)

    print("KERNEL_OK")
</pallas_src>

<mosaic_0001>
module attributes {stable_mosaic.version = 11 : i64} {
  func.func @kernel(%arg0: i32, %arg1: memref<1x8x2xf32, #tpu.memory_space<vmem>>, %arg2: memref<1x2x8xf32, #tpu.memory_space<vmem>>, %arg3: memref<1x1x1xf32, #tpu.memory_space<vmem>>, %arg4: memref<8x1xf32, #tpu.memory_space<vmem>>, %arg5: memref<1x8xf32, #tpu.memory_space<vmem>>, %arg6: memref<8x1xf32, #tpu.memory_space<vmem>>, %arg7: memref<1x8xf32, #tpu.memory_space<vmem>>, %arg8: memref<8x8xf32, #tpu.memory_space<vmem>>, %arg9: memref<1x8xf32, #tpu.memory_space<vmem>>, %arg10: memref<1xi32, #tpu.memory_space<smem>>) attributes {dimension_semantics = [#tpu.dimension_semantics<parallel>], iteration_bounds = array<i64: 2>, scalar_prefetch = 0 : i64, scratch_operands = 7 : i64, tpu.core_type = #tpu.core_type<tc>, window_params = [{transform_indices = @transform_0, window_bounds = array<i64: 1, 8, 2>}, {transform_indices = @transform_1, window_bounds = array<i64: 1, 2, 8>}, {transform_indices = @transform_2, window_bounds = array<i64: 1, 1, 1>}]} {
    %c0 = arith.constant 0 : index
    %c0_0 = arith.constant 0 : index
    %c0_1 = arith.constant 0 : index
    %0 = vector.load %arg1[%c0, %c0_0, %c0_1] : memref<1x8x2xf32, #tpu.memory_space<vmem>>, vector<1x8x2xf32>
    %1 = vector.shape_cast %0 : vector<1x8x2xf32> to vector<8x2xf32>
    %c0_2 = arith.constant 0 : index
    %c0_3 = arith.constant 0 : index
    %c0_4 = arith.constant 0 : index
    %2 = vector.load %arg2[%c0_2, %c0_3, %c0_4] : memref<1x2x8xf32, #tpu.memory_space<vmem>>, vector<1x2x8xf32>
    %3 = vector.shape_cast %2 : vector<1x2x8xf32> to vector<2x8xf32>
    %4 = vector.extract_strided_slice %1 {offsets = [0, 0], sizes = [8, 1], strides = [1, 1]} : vector<8x2xf32> to vector<8x1xf32>
    %5 = vector.extract_strided_slice %3 {offsets = [0, 0], sizes = [1, 8], strides = [1, 1]} : vector<2x8xf32> to vector<1x8xf32>
    %6 = vector.broadcast %4 : vector<8x1xf32> to vector<8x8xf32>
    %7 = vector.broadcast %5 : vector<1x8xf32> to vector<8x8xf32>
    %8 = arith.subf %6, %7 : vector<8x8xf32>
    %9 = arith.mulf %8, %8 : vector<8x8xf32>
    %10 = vector.extract_strided_slice %1 {offsets = [0, 1], sizes = [8, 1], strides = [1, 1]} : vector<8x2xf32> to vector<8x1xf32>
    %11 = vector.extract_strided_slice %3 {offsets = [1, 0], sizes = [1, 8], strides = [1, 1]} : vector<2x8xf32> to vector<1x8xf32>
    %12 = vector.broadcast %10 : vector<8x1xf32> to vector<8x8xf32>
    %13 = vector.broadcast %11 : vector<1x8xf32> to vector<8x8xf32>
    %14 = arith.subf %12, %13 : vector<8x8xf32>
    %15 = arith.mulf %14, %14 : vector<8x8xf32>
    %16 = arith.addf %9, %15 : vector<8x8xf32>
    %cst = arith.constant 0.000000e+00 : f32
    %17 = vector.broadcast %cst : f32 to vector<8x8xf32>
    %18 = arith.subf %17, %16 : vector<8x8xf32>
    %cst_5 = arith.constant 2.000000e+00 : f32
    %19 = vector.broadcast %cst_5 : f32 to vector<8x8xf32>
    %20 = arith.mulf %18, %19 : vector<8x8xf32>
    %cst_6 = arith.constant 5.30361319 : f32
    %21 = vector.broadcast %cst_6 : f32 to vector<8x8xf32>
    %22 = arith.subf %20, %21 : vector<8x8xf32>
    %23 = math.exp %22 : vector<8x8xf32>
    %cst_7 = arith.constant 1.000000e+00 : f32
    %24 = vector.broadcast %cst_7 : f32 to vector<8x1xf32>
    %c0_8 = arith.constant 0 : index
    %c0_9 = arith.constant 0 : index
    %25 = vector.load %arg4[%c0_8, %c0_9] : memref<8x1xf32, #tpu.memory_space<vmem>>, vector<8x1xf32>
    tpu.vector_store %arg4[%c0_8, %c0_9], %24 {strides = array<i32>} : memref<8x1xf32, #tpu.memory_space<vmem>>, vector<8x1xf32>,
    %cst_10 = arith.constant 1.000000e+00 : f32
    %26 = vector.broadcast %cst_10 : f32 to vector<1x8xf32>
    %c0_11 = arith.constant 0 : index
    %c0_12 = arith.constant 0 : index
    %27 = vector.load %arg5[%c0_11, %c0_12] : memref<1x8xf32, #tpu.memory_space<vmem>>, vector<1x8xf32>
    tpu.vector_store %arg5[%c0_11, %c0_12], %26 {strides = array<i32>} : memref<1x8xf32, #tpu.memory_space<vmem>>, vector<1x8xf32>,
    %cst_13 = arith.constant 0.000000e+00 : f32
    %28 = vector.broadcast %cst_13 : f32 to vector<8x1xf32>
    %c0_14 = arith.constant 0 : index
    %c0_15 = arith.constant 0 : index
    %29 = vector.load %arg6[%c0_14, %c0_15] : memref<8x1xf32, #tpu.memory_space<vmem>>, vector<8x1xf32>
    tpu.vector_store %arg6[%c0_14, %c0_15], %28 {strides = array<i32>} : memref<8x1xf32, #tpu.memory_space<vmem>>, vector<8x1xf32>,
    %cst_16 = arith.constant 0.000000e+00 : f32
    %30 = vector.broadcast %cst_16 : f32 to vector<1x8xf32>
    %c0_17 = arith.constant 0 : index
    %c0_18 = arith.constant 0 : index
    %31 = vector.load %arg7[%c0_17, %c0_18] : memref<1x8xf32, #tpu.memory_space<vmem>>, vector<1x8xf32>
    tpu.vector_store %arg7[%c0_17, %c0_18], %30 {strides = array<i32>} : memref<1x8xf32, #tpu.memory_space<vmem>>, vector<1x8xf32>,
    %c0_19 = arith.constant 0 : index
    %c0_20 = arith.constant 0 : index
    %32 = vector.load %arg8[%c0_19, %c0_20] : memref<8x8xf32, #tpu.memory_space<vmem>>, vector<8x8xf32>
    tpu.vector_store %arg8[%c0_19, %c0_20], %23 {strides = array<i32>} : memref<8x8xf32, #tpu.memory_space<vmem>>, vector<8x8xf32>,
    %cst_21 = arith.constant dense<0.000000e+00> : vector<8xf32>
    %33 = vector.multi_reduction <add>, %23, %cst_21 [0] : vector<8x8xf32> to vector<8xf32>
    %34 = vector.shape_cast %33 : vector<8xf32> to vector<1x8xf32>
    %c0_22 = arith.constant 0 : index
    %c0_23 = arith.constant 0 : index
    %35 = vector.load %arg9[%c0_22, %c0_23] : memref<1x8xf32, #tpu.memory_space<vmem>>, vector<1x8xf32>
    tpu.vector_store %arg9[%c0_22, %c0_23], %34 {strides = array<i32>} : memref<1x8xf32, #tpu.memory_space<vmem>>, vector<1x8xf32>,
    %c0_i32 = arith.constant 0 : i32
    %c0_24 = arith.constant 0 : index
    %36 = memref.load %arg10[%c0_24] : memref<1xi32, #tpu.memory_space<smem>>
    memref.store %c0_i32, %arg10[%c0_24] : memref<1xi32, #tpu.memory_space<smem>>
    %c0_i32_25 = arith.constant 0 : i32
    %c50_i32 = arith.constant 50 : i32
    %37 = arith.addi %c0_i32_25, %c50_i32 : i32
    %c1_i32 = arith.constant 1 : i32
    scf.for %arg11 = %c0_i32_25 to %37 step %c1_i32  : i32 {
      %c0_53 = arith.constant 0 : index
      %94 = memref.load %arg10[%c0_53] : memref<1xi32, #tpu.memory_space<smem>>
      %c0_i32_54 = arith.constant 0 : i32
      %95 = arith.cmpi eq, %94, %c0_i32_54 : i32
      %96 = arith.extui %95 : i1 to i32
      %c0_i32_55 = arith.constant 0 : i32
      %97 = arith.cmpi ne, %96, %c0_i32_55 : i32
      scf.if %97 {
        %c0_56 = arith.constant 0 : index
        %c0_57 = arith.constant 0 : index
        %98 = vector.load %arg8[%c0_56, %c0_57] : memref<8x8xf32, #tpu.memory_space<vmem>>, vector<8x8xf32>
        %c0_58 = arith.constant 0 : index
        %c0_59 = arith.constant 0 : index
        %99 = vector.load %arg9[%c0_58, %c0_59] : memref<1x8xf32, #tpu.memory_space<vmem>>, vector<1x8xf32>
        %cst_60 = arith.constant 1.250000e-01 : f32
        %100 = vector.broadcast %cst_60 : f32 to vector<1x8xf32>
        %101 = arith.divf %100, %99 : vector<1x8xf32>
        %102 = vector.broadcast %101 : vector<1x8xf32> to vector<8x8xf32>
        %103 = arith.mulf %98, %102 : vector<8x8xf32>
        %cst_61 = arith.constant dense<0.000000e+00> : vector<8xf32>
        %104 = vector.multi_reduction <add>, %103, %cst_61 [1] : vector<8x8xf32> to vector<8xf32>
        %105 = vector.shape_cast %104 : vector<8xf32> to vector<8x1xf32>
        %cst_62 = arith.constant 1.250000e-01 : f32
        %106 = vector.broadcast %cst_62 : f32 to vector<8x1xf32>
        %107 = arith.divf %106, %105 : vector<8x1xf32>
        %108 = vector.broadcast %107 : vector<8x1xf32> to vector<8x8xf32>
        %109 = arith.mulf %98, %108 : vector<8x8xf32>
        %cst_63 = arith.constant dense<0.000000e+00> : vector<8xf32>
        %110 = vector.multi_reduction <add>, %109, %cst_63 [0] : vector<8x8xf32> to vector<8xf32>
        %111 = vector.shape_cast %110 : vector<8xf32> to vector<1x8xf32>
        %c0_64 = arith.constant 0 : index
        %c0_65 = arith.constant 0 : index
        %112 = vector.load %arg4[%c0_64, %c0_65] : memref<8x1xf32, #tpu.memory_space<vmem>>, vector<8x1xf32>
        tpu.vector_store %arg4[%c0_64, %c0_65], %107 {strides = array<i32>} : memref<8x1xf32, #tpu.memory_space<vmem>>, vector<8x1xf32>,
        %c0_66 = arith.constant 0 : index
        %c0_67 = arith.constant 0 : index
        %113 = vector.load %arg5[%c0_66, %c0_67] : memref<1x8xf32, #tpu.memory_space<vmem>>, vector<1x8xf32>
        tpu.vector_store %arg5[%c0_66, %c0_67], %101 {strides = array<i32>} : memref<1x8xf32, #tpu.memory_space<vmem>>, vector<1x8xf32>,
        %c0_68 = arith.constant 0 : index
        %c0_69 = arith.constant 0 : index
        %114 = vector.load %arg9[%c0_68, %c0_69] : memref<1x8xf32, #tpu.memory_space<vmem>>, vector<1x8xf32>
        tpu.vector_store %arg9[%c0_68, %c0_69], %111 {strides = array<i32>} : memref<1x8xf32, #tpu.memory_space<vmem>>, vector<1x8xf32>,
        %115 = arith.mulf %101, %111 : vector<1x8xf32>
        %cst_70 = arith.constant 1.250000e-01 : f32
        %116 = vector.broadcast %cst_70 : f32 to vector<1x8xf32>
        %117 = arith.subf %115, %116 : vector<1x8xf32>
        %118 = math.absf %117 : vector<1x8xf32>
        %119 = vector.shape_cast %118 : vector<1x8xf32> to vector<1x1x8xf32>
        %cst_71 = arith.constant dense<0xFF800000> : vector<1xf32>
        %120 = vector.multi_reduction <maximumf>, %119, %cst_71 [1, 2] : vector<1x1x8xf32> to vector<1xf32>
        %121 = vector.shape_cast %120 : vector<1xf32> to vector<1x1x1xf32>
        %122 = vector.extract %121[0, 0, 0] : f32 from vector<1x1x1xf32>
        %cst_72 = arith.constant 9.99999974E-5 : f32
        %123 = arith.cmpf olt, %122, %cst_72 : f32
        %cst_73 = arith.constant 1.250000e-05 : f32
        %124 = arith.cmpf olt, %122, %cst_73 : f32
        %125 = arith.ori %123, %124 : i1
        %126 = arith.extui %125 : i1 to i32
        %c0_74 = arith.constant 0 : index
        %127 = memref.load %arg10[%c0_74] : memref<1xi32, #tpu.memory_space<smem>>
        memref.store %126, %arg10[%c0_74] : memref<1xi32, #tpu.memory_space<smem>>
        %128 = vector.shape_cast %107 : vector<8x1xf32> to vector<1x8x1xf32>
        %cst_75 = arith.constant dense<0xFF800000> : vector<1xf32>
        %129 = vector.multi_reduction <maximumf>, %128, %cst_75 [1, 2] : vector<1x8x1xf32> to vector<1xf32>
        %130 = vector.shape_cast %129 : vector<1xf32> to vector<1x1x1xf32>
        %131 = vector.extract %130[0, 0, 0] : f32 from vector<1x1x1xf32>
        %132 = vector.shape_cast %101 : vector<1x8xf32> to vector<1x1x8xf32>
        %cst_76 = arith.constant dense<0xFF800000> : vector<1xf32>
        %133 = vector.multi_reduction <maximumf>, %132, %cst_76 [1, 2] : vector<1x1x8xf32> to vector<1xf32>
        %134 = vector.shape_cast %133 : vector<1xf32> to vector<1x1x1xf32>
        %135 = vector.extract %134[0, 0, 0] : f32 from vector<1x1x1xf32>
        %136 = arith.maximumf %131, %135 : f32
        %true = arith.constant true
        %137 = arith.xori %125, %true : i1
        %cst_77 = arith.constant 1.000000e+02 : f32
        %138 = arith.cmpf ogt, %136, %cst_77 : f32
        %139 = arith.andi %137, %138 : i1
        %140 = arith.extui %139 : i1 to i32
        %c0_i32_78 = arith.constant 0 : i32
        %141 = arith.cmpi ne, %140, %c0_i32_78 : i32
        scf.if %141 {
          %c0_79 = arith.constant 0 : index
          %c0_80 = arith.constant 0 : index
          %142 = vector.load %arg6[%c0_79, %c0_80] : memref<8x1xf32, #tpu.memory_space<vmem>>, vector<8x1xf32>
          %143 = math.log %107 : vector<8x1xf32>
          %cst_81 = arith.constant 5.000000e-01 : f32
          %144 = vector.broadcast %cst_81 : f32 to vector<8x1xf32>
          %145 = arith.mulf %144, %143 : vector<8x1xf32>
          %146 = arith.subf %142, %145 : vector<8x1xf32>
          %c0_82 = arith.constant 0 : index
          %c0_83 = arith.constant 0 : index
          %147 = vector.load %arg6[%c0_82, %c0_83] : memref<8x1xf32, #tpu.memory_space<vmem>>, vector<8x1xf32>
          tpu.vector_store %arg6[%c0_82, %c0_83], %146 {strides = array<i32>} : memref<8x1xf32, #tpu.memory_space<vmem>>, vector<8x1xf32>,
          %c0_84 = arith.constant 0 : index
          %c0_85 = arith.constant 0 : index
          %148 = vector.load %arg7[%c0_84, %c0_85] : memref<1x8xf32, #tpu.memory_space<vmem>>, vector<1x8xf32>
          %149 = math.log %101 : vector<1x8xf32>
          %cst_86 = arith.constant 5.000000e-01 : f32
          %150 = vector.broadcast %cst_86 : f32 to vector<1x8xf32>
          %151 = arith.mulf %150, %149 : vector<1x8xf32>
          %152 = arith.subf %148, %151 : vector<1x8xf32>
          %c0_87 = arith.constant 0 : index
          %c0_88 = arith.constant 0 : index
          %153 = vector.load %arg7[%c0_87, %c0_88] : memref<1x8xf32, #tpu.memory_space<vmem>>, vector<1x8xf32>
          tpu.vector_store %arg7[%c0_87, %c0_88], %152 {strides = array<i32>} : memref<1x8xf32, #tpu.memory_space<vmem>>, vector<1x8xf32>,
          %cst_89 = arith.constant 1.000000e+00 : f32
          %154 = vector.broadcast %cst_89 : f32 to vector<8x1xf32>
          %c0_90 = arith.constant 0 : index
          %c0_91 = arith.constant 0 : index
          %155 = vector.load %arg4[%c0_90, %c0_91] : memref<8x1xf32, #tpu.memory_space<vmem>>, vector<8x1xf32>
          tpu.vector_store %arg4[%c0_90, %c0_91], %154 {strides = array<i32>} : memref<8x1xf32, #tpu.memory_space<vmem>>, vector<8x1xf32>,
          %cst_92 = arith.constant 1.000000e+00 : f32
          %156 = vector.broadcast %cst_92 : f32 to vector<1x8xf32>
          %c0_93 = arith.constant 0 : index
          %c0_94 = arith.constant 0 : index
          %157 = vector.load %arg5[%c0_93, %c0_94] : memref<1x8xf32, #tpu.memory_space<vmem>>, vector<1x8xf32>
          tpu.vector_store %arg5[%c0_93, %c0_94], %156 {strides = array<i32>} : memref<1x8xf32, #tpu.memory_space<vmem>>, vector<1x8xf32>,
          %158 = vector.broadcast %107 : vector<8x1xf32> to vector<8x8xf32>
          %159 = arith.mulf %98, %158 : vector<8x8xf32>
          %160 = vector.broadcast %101 : vector<1x8xf32> to vector<8x8xf32>
          %161 = arith.mulf %159, %160 : vector<8x8xf32>
          %c0_95 = arith.constant 0 : index
          %c0_96 = arith.constant 0 : index
          %162 = vector.load %arg8[%c0_95, %c0_96] : memref<8x8xf32, #tpu.memory_space<vmem>>, vector<8x8xf32>
          tpu.vector_store %arg8[%c0_95, %c0_96], %161 {strides = array<i32>} : memref<8x8xf32, #tpu.memory_space<vmem>>, vector<8x8xf32>,
          %cst_97 = arith.constant dense<0.000000e+00> : vector<8xf32>
          %163 = vector.multi_reduction <add>, %161, %cst_97 [0] : vector<8x8xf32> to vector<8xf32>
          %164 = vector.shape_cast %163 : vector<8xf32> to vector<1x8xf32>
          %c0_98 = arith.constant 0 : index
          %c0_99 = arith.constant 0 : index
          %165 = vector.load %arg9[%c0_98, %c0_99] : memref<1x8xf32, #tpu.memory_space<vmem>>, vector<1x8xf32>
          tpu.vector_store %arg9[%c0_98, %c0_99], %164 {strides = array<i32>} : memref<1x8xf32, #tpu.memory_space<vmem>>, vector<1x8xf32>,
        } else {
        }
      } else {
      }
    }
    %c0_26 = arith.constant 0 : index
    %c0_27 = arith.constant 0 : index
    %38 = vector.load %arg8[%c0_26, %c0_27] : memref<8x8xf32, #tpu.memory_space<vmem>>, vector<8x8xf32>
    %c0_28 = arith.constant 0 : index
    %c0_29 = arith.constant 0 : index
    %39 = vector.load %arg6[%c0_28, %c0_29] : memref<8x1xf32, #tpu.memory_space<vmem>>, vector<8x1xf32>
    %c0_30 = arith.constant 0 : index
    %c0_31 = arith.constant 0 : index
    %40 = vector.load %arg7[%c0_30, %c0_31] : memref<1x8xf32, #tpu.memory_space<vmem>>, vector<1x8xf32>
    %c0_32 = arith.constant 0 : index
    %c0_33 = arith.constant 0 : index
    %41 = vector.load %arg5[%c0_32, %c0_33] : memref<1x8xf32, #tpu.memory_space<vmem>>, vector<1x8xf32>
    %42 = vector.broadcast %41 : vector<1x8xf32> to vector<8x8xf32>
    %43 = arith.mulf %38, %42 : vector<8x8xf32>
    %cst_34 = arith.constant dense<0.000000e+00> : vector<8xf32>
    %44 = vector.multi_reduction <add>, %43, %cst_34 [1] : vector<8x8xf32> to vector<8xf32>
    %45 = vector.shape_cast %44 : vector<8xf32> to vector<8x1xf32>
    %c0_35 = arith.constant 0 : index
    %c0_36 = arith.constant 0 : index
    %46 = vector.load %arg9[%c0_35, %c0_36] : memref<1x8xf32, #tpu.memory_space<vmem>>, vector<1x8xf32>
    %47 = math.log %45 : vector<8x1xf32>
    %cst_37 = arith.constant -2.07944155 : f32
    %48 = vector.broadcast %cst_37 : f32 to vector<8x1xf32>
    %49 = arith.subf %47, %48 : vector<8x1xf32>
    %cst_38 = arith.constant 5.000000e-01 : f32
    %50 = vector.broadcast %cst_38 : f32 to vector<8x1xf32>
    %51 = arith.mulf %50, %49 : vector<8x1xf32>
    %52 = arith.addf %39, %51 : vector<8x1xf32>
    %53 = math.log %46 : vector<1x8xf32>
    %cst_39 = arith.constant -2.07944155 : f32
    %54 = vector.broadcast %cst_39 : f32 to vector<1x8xf32>
    %55 = arith.subf %53, %54 : vector<1x8xf32>
    %cst_40 = arith.constant 5.000000e-01 : f32
    %56 = vector.broadcast %cst_40 : f32 to vector<1x8xf32>
    %57 = arith.mulf %56, %55 : vector<1x8xf32>
    %58 = arith.addf %40, %57 : vector<1x8xf32>
    %59 = vector.shape_cast %52 : vector<8x1xf32> to vector<1x8x1xf32>
    %cst_41 = arith.constant dense<0.000000e+00> : vector<1xf32>
    %60 = vector.multi_reduction <add>, %59, %cst_41 [1, 2] : vector<1x8x1xf32> to vector<1xf32>
    %61 = vector.shape_cast %60 : vector<1xf32> to vector<1x1x1xf32>
    %62 = vector.extract %61[0, 0, 0] : f32 from vector<1x1x1xf32>
    %63 = vector.broadcast %62 : f32 to vector<1x1xf32>
    %cst_42 = arith.constant 1.250000e-01 : f32
    %64 = vector.broadcast %cst_42 : f32 to vector<1x1xf32>
    %65 = arith.mulf %63, %64 : vector<1x1xf32>
    %66 = vector.shape_cast %58 : vector<1x8xf32> to vector<1x1x8xf32>
    %cst_43 = arith.constant dense<0.000000e+00> : vector<1xf32>
    %67 = vector.multi_reduction <add>, %66, %cst_43 [1, 2] : vector<1x1x8xf32> to vector<1xf32>
    %68 = vector.shape_cast %67 : vector<1xf32> to vector<1x1x1xf32>
    %69 = vector.extract %68[0, 0, 0] : f32 from vector<1x1x1xf32>
    %70 = vector.broadcast %69 : f32 to vector<1x1xf32>
    %cst_44 = arith.constant 1.250000e-01 : f32
    %71 = vector.broadcast %cst_44 : f32 to vector<1x1xf32>
    %72 = arith.mulf %70, %71 : vector<1x1xf32>
    %cst_45 = arith.constant 1.000000e+00 : f32
    %73 = vector.broadcast %cst_45 : f32 to vector<8x1xf32>
    %74 = arith.divf %73, %45 : vector<8x1xf32>
    %75 = vector.broadcast %74 : vector<8x1xf32> to vector<8x8xf32>
    %76 = arith.mulf %38, %75 : vector<8x8xf32>
    %cst_46 = arith.constant 1.000000e+00 : f32
    %77 = vector.broadcast %cst_46 : f32 to vector<1x8xf32>
    %78 = arith.divf %77, %46 : vector<1x8xf32>
    %79 = vector.broadcast %78 : vector<1x8xf32> to vector<8x8xf32>
    %80 = arith.mulf %76, %79 : vector<8x8xf32>
    %81 = vector.shape_cast %80 : vector<8x8xf32> to vector<1x8x8xf32>
    %cst_47 = arith.constant dense<0.000000e+00> : vector<1xf32>
    %82 = vector.multi_reduction <add>, %81, %cst_47 [1, 2] : vector<1x8x8xf32> to vector<1xf32>
    %83 = vector.shape_cast %82 : vector<1xf32> to vector<1x1x1xf32>
    %84 = vector.extract %83[0, 0, 0] : f32 from vector<1x1x1xf32>
    %85 = vector.broadcast %84 : f32 to vector<1x1xf32>
    %cst_48 = arith.constant 7.812500e-03 : f32
    %86 = vector.broadcast %cst_48 : f32 to vector<1x1xf32>
    %87 = arith.mulf %85, %86 : vector<1x1xf32>
    %88 = arith.addf %65, %72 : vector<1x1xf32>
    %89 = arith.addf %88, %87 : vector<1x1xf32>
    %cst_49 = arith.constant 0.000000e+00 : f32
    %90 = vector.broadcast %cst_49 : f32 to vector<1x1xf32>
    %91 = arith.subf %90, %89 : vector<1x1xf32>
    %92 = vector.shape_cast %91 : vector<1x1xf32> to vector<1x1x1xf32>
    %c0_50 = arith.constant 0 : index
    %c0_51 = arith.constant 0 : index
    %c0_52 = arith.constant 0 : index
    %93 = vector.load %arg3[%c0_50, %c0_51, %c0_52] : memref<1x1x1xf32, #tpu.memory_space<vmem>>, vector<1x1x1xf32>
    tpu.vector_store %arg3[%c0_50, %c0_51, %c0_52], %92 {strides = array<i32>} : memref<1x1x1xf32, #tpu.memory_space<vmem>>, vector<1x1x1xf32>,
    return
  }
  func.func @transform_0(%arg0: i32) -> (i32, i32, i32) {
    %c0_i32 = arith.constant 0 : i32
    %c0_i32_0 = arith.constant 0 : i32
    %c0_i32_1 = arith.constant 0 : i32
    return %arg0, %c0_i32, %c0_i32_0 : i32, i32, i32
  }
  func.func @transform_1(%arg0: i32) -> (i32, i32, i32) {
    %c0_i32 = arith.constant 0 : i32
    %c0_i32_0 = arith.constant 0 : i32
    %c0_i32_1 = arith.constant 0 : i32
    return %arg0, %c0_i32, %c0_i32_0 : i32, i32, i32
  }
  func.func @transform_2(%arg0: i32) -> (i32, i32, i32) {
    %c0_i32 = arith.constant 0 : i32
    %c0_i32_0 = arith.constant 0 : i32
    %c0_i32_1 = arith.constant 0 : i32
    return %arg0, %c0_i32, %c0_i32_0 : i32, i32, i32
  }
}

</mosaic_0001>

<llo_original>
// kernel: tpu_custom_call.1
$region0: #{tpu_custom_call.1}
  #allocation0 [shape = 'u32[]', space=smem, size = 0x4, offset = 0x4, fixed_abs, tag = 'smem constant byte address 0x4 - core index']
  #allocation1 [shape = 'u32[144,128]{1,0:T(1,128)}', space=vmem, size = 0x12000, scoped, tag = 'internal scratch']
  #allocation2 [shape = 'f32[8,1]{1,0:T(8,128)}', space=vmem, size = 0x1000, scoped, tag = 'scratch operand']
  #allocation3 [shape = 'f32[1,8]{1,0:T(1,128)}', space=vmem, size = 0x200, scoped, tag = 'scratch operand']
  #allocation4 [shape = 'f32[8,1]{1,0:T(8,128)}', space=vmem, size = 0x1000, scoped, tag = 'scratch operand']
  #allocation5 [shape = 'f32[1,8]{1,0:T(1,128)}', space=vmem, size = 0x200, scoped, tag = 'scratch operand']
  #allocation6 [shape = 'f32[8,8]{1,0:T(8,128)}', space=vmem, size = 0x1000, scoped, tag = 'scratch operand']
  #allocation7 [shape = 'f32[1,8]{1,0:T(1,128)}', space=vmem, size = 0x200, scoped, tag = 'scratch operand']
  #allocation8 [shape = 's32[1]{0:T(128)}', space=smem, size = 0x200, scoped, tag = 'scratch operand']
  %s0 = inlined_call_operand.vmem [shape: f32[2,8,2], index: 0, kind: input, shape index: {}]
  %s1 = inlined_call_operand.vmem [shape: f32[2,2,8], index: 1, kind: input, shape index: {}]
  %s2 = inlined_call_operand.vmem [shape: f32[2,1,1], index: 2, kind: output, shape index: {}]
  %s3 = sld [smem:[#allocation0]]
  $region56: #{tpu_custom_call.1} parent=0
    _
  %s5 = ssub.s32 1, %s3
  %s6 = scalar_select 0, %s5, %s3
  loop: start=0, step=1, limit=4
  $region2: #{tpu_custom_call.1} parent=0 // loop_pre_header
    _
  $region3: #{tpu_custom_call.1} parent=0 // loop_header
    %s8 = sphi 0, %s12
    %p9 = scmp.ge.s32.totalorder %s8, 4
    %s18 = sphi 0, %s20
    %s21 = sphi 0, %s18
    %s22 = sphi 0, %s21
    %s38 = sphi 0, %s22
    %s44 = sphi 0, %s46
    %s47 = sphi 0, %s44
    %s48 = sphi 0, %s47
    %s64 = sphi 0, %s48
    %s70 = sphi 0, %s72
    %s73 = sphi 0, %s70
    %s74 = sphi 0, %s73
    %s90 = sphi 0, %s74
  $region4: #{tpu_custom_call.1} parent=0 // loop_header_branch
    %11 = sbr.rel (%p9) target = $region8
  $region5: #{tpu_custom_call.1} parent=0 // loop_body
    %s13 = ssub.s32 %s8, 1
    %s14 = ssub.s32 %s8, 2
    %s15 = sadd.s32 %s8, 1
    %s16 = ssub.s32 %s8, %s15
    %p17 = scmp.eq.s32.totalorder %s16, 0
    %s19 = sadd.s32 %s18, 1
    %s20 = scalar_select %p17, %s18, %s19
    %p23 = pneg %p17
    %p24 = scmp.eq.s32.totalorder %s8, 1
    %p25 = por %p23, %p24
    %p26 = scmp.ne.s32.totalorder %s18, %s21
    %p27 = scmp.eq.s32.totalorder %s8, 0
    %p28 = por %p26, %p27
    %p29 = scmp.ne.s32.totalorder %s18, %s21
    %p30 = scmp.eq.s32.totalorder %s13, 1
    %p31 = por %p29, %p30
    %p32 = scmp.ne.s32.totalorder %s21, %s22
    %p33 = scmp.eq.s32.totalorder %s13, 0
    %p34 = por %p32, %p33
    %p35 = scmp.ne.s32.totalorder %s21, %s22
    %p36 = scmp.eq.s32.totalorder %s14, 1
    %p37 = por %p35, %p36
    %p39 = scmp.ne.s32.totalorder %s22, %s38
    %p40 = scmp.eq.s32.totalorder %s14, 0
    %p41 = por %p39, %p40
    %s42 = ssub.s32 %s8, %s15
    %p43 = scmp.eq.s32.totalorder %s42, 0
    %s45 = sadd.s32 %s44, 1
    %s46 = scalar_select %p43, %s44, %s45
    %p49 = pneg %p43
    %p50 = scmp.eq.s32.totalorder %s8, 1
    %p51 = por %p49, %p50
    %p52 = scmp.ne.s32.totalorder %s44, %s47
    %p53 = scmp.eq.s32.totalorder %s8, 0
    %p54 = por %p52, %p53
    %p55 = scmp.ne.s32.totalorder %s44, %s47
    %p56 = scmp.eq.s32.totalorder %s13, 1
    %p57 = por %p55, %p56
    %p58 = scmp.ne.s32.totalorder %s47, %s48
    %p59 = scmp.eq.s32.totalorder %s13, 0
    %p60 = por %p58, %p59
    %p61 = scmp.ne.s32.totalorder %s47, %s48
    %p62 = scmp.eq.s32.totalorder %s14, 1
    %p63 = por %p61, %p62
    %p65 = scmp.ne.s32.totalorder %s48, %s64
    %p66 = scmp.eq.s32.totalorder %s14, 0
    %p67 = por %p65, %p66
    %s68 = ssub.s32 %s8, %s15
    %p69 = scmp.eq.s32.totalorder %s68, 0
    %s71 = sadd.s32 %s70, 1
    %s72 = scalar_select %p69, %s70, %s71
    %p75 = pneg %p69
    %p76 = scmp.eq.s32.totalorder %s8, 1
    %p77 = por %p75, %p76
    %p78 = scmp.ne.s32.totalorder %s70, %s73
    %p79 = scmp.eq.s32.totalorder %s8, 0
    %p80 = por %p78, %p79
    %p81 = scmp.ne.s32.totalorder %s70, %s73
    %p82 = scmp.eq.s32.totalorder %s13, 1
    %p83 = por %p81, %p82
    %p84 = scmp.ne.s32.totalorder %s73, %s74
    %p85 = scmp.eq.s32.totalorder %s13, 0
    %p86 = por %p84, %p85
    %p87 = scmp.ne.s32.totalorder %s73, %s74
    %p88 = scmp.eq.s32.totalorder %s14, 1
    %p89 = por %p87, %p88
    %p91 = scmp.ne.s32.totalorder %s74, %s90
    %p92 = scmp.eq.s32.totalorder %s14, 0
    %p93 = por %p91, %p92
    %p94 = scmp.le.s32.totalorder 1, %s8
    %p95 = scmp.lt.s32.totalorder %s8, 3
    %p96 = pnand %p94, %p95
    %p97 = pneg %p96
    // Predicated region
    $region9: #{tpu_custom_call.1} parent=5 // pred_check
      _
    $region10: #{tpu_custom_call.1} parent=5 // pred_check_branch
      %99 = sbr.rel (%p96) target = $region12
    $region11: #{tpu_custom_call.1} parent=5 // pred_region
      %s100 = ssub.s32 %s8, 1
    $region12: #{tpu_custom_call.1} parent=5 // pred_fallthru
      _
    %p101 = scmp.lt.s32.totalorder %s8, 2
    // Predicated region
    $region13: #{tpu_custom_call.1} parent=5 // pred_check
      %p102 = pneg %p101
    $region14: #{tpu_custom_call.1} parent=5 // pred_check_branch
      %104 = sbr.rel (%p102) target = $region16
    $region15: #{tpu_custom_call.1} parent=5 // pred_region
      // Predicated region
      $region17: #{tpu_custom_call.1} parent=15 // pred_check
        %p105 = pneg %p28
      $region18: #{tpu_custom_call.1} parent=15 // pred_check_branch
        %107 = sbr.rel (%p105) target = $region20
      $region19: #{tpu_custom_call.1} parent=15 // pred_region
        %p108 = scmp.lt.s32.totalorder %s8, 1
        %s109 = scalar_select %p108, %s8, 1
        %s110 = smul.addr %s109, 8
        %s111 = scalar_lea.vmem %s0, %s110
      $region20: #{tpu_custom_call.1} parent=15 // pred_fallthru
        _
      // Predicated region
      $region21: #{tpu_custom_call.1} parent=15 // pred_check
        %p112 = pneg %p54
      $region22: #{tpu_custom_call.1} parent=15 // pred_check_branch
        %114 = sbr.rel (%p112) target = $region24
      $region23: #{tpu_custom_call.1} parent=15 // pred_region
        %p115 = scmp.lt.s32.totalorder %s8, 1
        %s116 = scalar_select %p115, %s8, 1
        %s117 = smul.addr %s116, 2
        %s118 = scalar_lea.vmem %s1, %s117
      $region24: #{tpu_custom_call.1} parent=15 // pred_fallthru
        _
    $region16: #{tpu_custom_call.1} parent=5 // pred_fallthru
      _
    %p119 = scmp.le.s32.totalorder 1, %s8
    %p120 = scmp.lt.s32.totalorder %s8, 3
    %p121 = pnand %p119, %p120
    %p122 = pneg %p121
    // Predicated region
    $region25: #{tpu_custom_call.1} parent=5 // pred_check
      _
    $region26: #{tpu_custom_call.1} parent=5 // pred_check_branch
      %124 = sbr.rel (%p121) target = $region28
    $region27: #{tpu_custom_call.1} parent=5 // pred_region
      %s125 = ssub.s32 %s8, 1
      %p126 = scmp.lt.s32.totalorder %s13, 1
      %s127 = scalar_select %p126, %s13, 1
      %s128 = smul.addr %s127, 8
      %s129 = scalar_lea.vmem %s0, %s128
      %p130 = pneg %p34
      %p131 = pneg %p31
      %p132 = scmp.lt.s32.totalorder %s13, 1
      %s133 = scalar_select %p132, %s13, 1
      %s134 = smul.addr %s133, 2
      %s135 = scalar_lea.vmem %s1, %s134
      %p136 = pneg %p60
      %p137 = pneg %p57
      %p138 = pneg %p86
      %p139 = pneg %p83
      %p140 = scmp.lt.s32.totalorder %s13, 1
      %s141 = scalar_select %p140, %s13, 1
      %s142 = scalar_lea.vmem %s2, %s141
      %p143 = scmp.lt.s32.totalorder %s13, 1
      %s144 = scalar_select %p143, %s13, 1
      %s145 = smul.addr %s144, 8
      %s146 = scalar_lea.vmem %s0, %s145
      %p147 = scmp.lt.s32.totalorder %s13, 1
      %s148 = scalar_select %p147, %s13, 1
      %s149 = smul.addr %s148, 2
      %s150 = scalar_lea.vmem %s1, %s149
      %p151 = scmp.lt.s32.totalorder %s13, 1
      %s152 = scalar_select %p151, %s13, 1
      %s153 = scalar_lea.vmem %s2, %s152
      %v154 = vld [vmem:[%s146] sm:$0xff]
      %v155 = vld [vmem:[%s150] sm:$0x3]
      %157 = vset.pattern.permute.xlu0 0
      %158 = vperm.xlu0 %157, %v154
      %v159 = vpop.permute.xlu0 %158
      %v161 = vlaneseq
      %v162 = vshrl.u32 %v161, 7
      %v163 = vsub.s32 0, %v162
      %v164 = vrot.slane %v155, %v163
      %v165 = vsub.f32 %v159, %v164
      %v166 = vmul.f32 %v165, %v165
      %167 = vset.pattern.permute.xlu0 1
      %168 = vperm.xlu0 %167, %v154
      %v169 = vpop.permute.xlu0 %168
      %v171 = vlaneseq
      %v172 = vshrl.u32 %v171, 7
      %v173 = vsub.s32 1, %v172
      %v174 = vrot.slane %v155, %v173
      %v175 = vsub.f32 %v169, %v174
      %v176 = vmul.f32 %v175, %v175
      %v177 = vadd.f32 %v166, %v176
      %v178 = vsub.f32 0.0, %v177
      %v179 = vmul.f32 %v178, 2.0
      %v180 = vsub.f32 %v179, 5.303613
      %v181 = vmul.f32 %v180, 1.442695
      %v182 = vpow.pop %v181
      %vm183 = vcmask 7168
      %184 = vst.msk [vmem:[#allocation2] sm:$0xff] %vm183, 1.0
      %vm185 = vcmask 57344
      %186 = vst.msk [vmem:[#allocation3] sm:$0x1] %vm185, 1.0
      %187 = vst.msk [vmem:[#allocation4] sm:$0xff] %vm183, 0.0
      %188 = vst.msk [vmem:[#allocation5] sm:$0x1] %vm185, 0.0
      %vm189 = vcmask 64512
      %190 = vst.msk [vmem:[#allocation6] sm:$0xff] %vm189, %v182
      %v191 = vsel %vm189, %v182, 0.0
      %v192 = vrot.slane %v191, 4
      %v193 = vadd.f32 %v191, %v192
      %v194 = vrot.slane %v193, 2
      %v195 = vadd.f32 %v193, %v194
      %v196 = vrot.slane %v195, 1
      %v197 = vadd.f32 %v195, %v196
      %198 = vst.msk [vmem:[#allocation7] sm:$0x1] %vm185, %v197
      %s199 = scalar_lea.smem [#allocation8], 0
      %200 = sst [smem:[%s199]] 0
      loop: start=0, step=1, limit=50
      $region29: #{tpu_custom_call.1} parent=27 // loop_pre_header
        _
      $region30: #{tpu_custom_call.1} parent=27 // loop_header
        %s202 = sphi 0, %s206
        %p203 = scmp.ge.s32.totalorder %s202, 50
      $region31: #{tpu_custom_call.1} parent=27 // loop_header_branch
        %205 = sbr.rel (%p203) target = $region35
      $region32: #{tpu_custom_call.1} parent=27 // loop_body
        %s207 = sld [smem:[#allocation8]]
        %p208 = scmp.eq.s32.totalorder %s207, 0
        // Predicated region
        $region36: #{tpu_custom_call.1} parent=32 // pred_check
          %p209 = pneg %p208
        $region37: #{tpu_custom_call.1} parent=32 // pred_check_branch
          %211 = sbr.rel (%p209) target = $region39
        $region38: #{tpu_custom_call.1} parent=32 // pred_region
          %v212 = vld [vmem:[#allocation6] sm:$0xff]
          %v213 = vld [vmem:[#allocation7] sm:$0x1]
          %v214 = vrcp.pop %v213
          %v215 = vmul.f32 0.125, %v214
          %v217 = vlaneseq
          %v218 = vshrl.u32 %v217, 7
          %v219 = vsub.s32 0, %v218
          %v220 = vrot.slane %v215, %v219
          %v222 = vmul.f32 %v212, %v220
          %v223 = vsel %vm189, %v222, 0.0
          %224 = vadd.xlane.f32.xlu0 %v223
          %v225 = vpop.xlane.xlu0 %224
          %v226 = vrcp.pop %v225
          %v227 = vmul.f32 0.125, %v226
          %v228 = vmul.f32 %v212, %v227
          %v229 = vsel %vm189, %v228, 0.0
          %v230 = vrot.slane %v229, 4
          %v231 = vadd.f32 %v229, %v230
          %v232 = vrot.slane %v231, 2
          %v233 = vadd.f32 %v231, %v232
          %v234 = vrot.slane %v233, 1
          %v235 = vadd.f32 %v233, %v234
          %236 = vst.msk [vmem:[#allocation2] sm:$0xff] %vm183, %v227
          %237 = vst.msk [vmem:[#allocation3] sm:$0x1] %vm185, %v215
          %238 = vst.msk [vmem:[#allocation7] sm:$0x1] %vm185, %v235
          %v239 = vmul.f32 %v215, %v235
          %v240 = vsub.f32 %v239, 0.125
          %v241 = vand.u32 2147483647, %v240
          %v242 = vsel %vm185, %v241, -inf
          %243 = vmax.xlane.f32.xlu0 %v242
          %v244 = vpop.xlane.xlu0 %243
          %v245 = vrot.slane %v244, 4
          %v246 = vmax.f32 %v244, %v245
          %v247 = vrot.slane %v246, 2
          %v248 = vmax.f32 %v246, %v247
          %v249 = vrot.slane %v248, 1
          %v250 = vmax.f32 %v248, %v249
          %s251 = vtos %v250
          %p252 = scmp.lt.f32.partialorder %s251, 0.0001
          %p253 = scmp.lt.f32.partialorder %s251, 1.25e-05
          %p254 = por %p252, %p253
          %s255 = scalar_select %p254, 1, 0
          %256 = sst [smem:[%s199]] %s255
          %v257 = vrot.slane %v227, 4
          %v258 = vmax.f32 %v227, %v257
          %v259 = vrot.slane %v258, 2
          %v260 = vmax.f32 %v258, %v259
          %v261 = vrot.slane %v260, 1
          %v262 = vmax.f32 %v260, %v261
          %s263 = vtos %v262
          %v264 = vsel %vm185, %v215, -inf
          %265 = vmax.xlane.f32.xlu0 %v264
          %v266 = vpop.xlane.xlu0 %265
          %v267 = vrot.slane %v266, 4
          %v268 = vmax.f32 %v266, %v267
          %v269 = vrot.slane %v268, 2
          %v270 = vmax.f32 %v268, %v269
          %v271 = vrot.slane %v270, 1
          %v272 = vmax.f32 %v270, %v271
          %s273 = vtos %v272
          %s274 = smax.f32 %s263, %s273
          %p275 = pneg %p254
          %p276 = scmp.gt.f32.partialorder %s274, 100.0
          %p277 = pnand %p275, %p276
          %p278 = pneg %p277
          // Predicated region
          $region40: #{tpu_custom_call.1} parent=38 // pred_check
            _
          $region41: #{tpu_custom_call.1} parent=38 // pred_check_branch
            %280 = sbr.rel (%p277) target = $region43
          $region42: #{tpu_custom_call.1} parent=38 // pred_region
            %v281 = vld [vmem:[#allocation4] sm:$0xff]
            %v282 = vlog2.pop %v227
            %v283 = vmul.f32 %v282, 0.6931472
            %v284 = vmul.f32 %v283, 0.5
            %v285 = vsub.f32 %v281, %v284
            %286 = vst.msk [vmem:[#allocation4] sm:$0xff] %vm183, %v285
            %v287 = vld [vmem:[#allocation5] sm:$0x1]
            %v288 = vlog2.pop %v215
            %v289 = vmul.f32 %v288, 0.6931472
            %v290 = vmul.f32 %v289, 0.5
            %v291 = vsub.f32 %v287, %v290
            %292 = vst.msk [vmem:[#allocation5] sm:$0x1] %vm185, %v291
            %293 = vst.msk [vmem:[#allocation2] sm:$0xff] %vm183, 1.0
            %294 = vst.msk [vmem:[#allocation3] sm:$0x1] %vm185, 1.0
            %v295 = vmul.f32 %v228, %v220
            %296 = vst.msk [vmem:[#allocation6] sm:$0xff] %vm189, %v295
            %v297 = vsel %vm189, %v295, 0.0
            %v298 = vrot.slane %v297, 4
            %v299 = vadd.f32 %v297, %v298
            %v300 = vrot.slane %v299, 2
            %v301 = vadd.f32 %v299, %v300
            %v302 = vrot.slane %v301, 1
            %v303 = vadd.f32 %v301, %v302
            %304 = vst.msk [vmem:[#allocation7] sm:$0x1] %vm185, %v303
          $region43: #{tpu_custom_call.1} parent=38 // pred_fallthru
            _
        $region39: #{tpu_custom_call.1} parent=32 // pred_fallthru
          _
      $region33: #{tpu_custom_call.1} parent=27 // loop_footer
        %s206 = sadd.s32 1, %s202
      $region34: #{tpu_custom_call.1} parent=27 // loop_footer_branch
        %201 = sbr.rel target = $region30
      $region35: #{tpu_custom_call.1} parent=27 // loop_exit
        _
      %v305 = vld [vmem:[#allocation6] sm:$0xff]
      %v306 = vld [vmem:[#allocation4] sm:$0xff]
      %v307 = vld [vmem:[#allocation5] sm:$0x1]
      %v308 = vld [vmem:[#allocation3] sm:$0x1]
      %v310 = vlaneseq
      %v311 = vshrl.u32 %v310, 7
      %v312 = vsub.s32 0, %v311
      %v313 = vrot.slane %v308, %v312
      %v315 = vmul.f32 %v305, %v313
      %v316 = vsel %vm189, %v315, 0.0
      %317 = vadd.xlane.f32.xlu0 %v316
      %v318 = vpop.xlane.xlu0 %317
      %v319 = vld [vmem:[#allocation7] sm:$0x1]
      %v320 = vlog2.pop %v318
      %v321 = vmul.f32 %v320, 0.6931472
      %v322 = vsub.f32 %v321, -2.0794415
      %v323 = vmul.f32 %v322, 0.5
      %v324 = vadd.f32 %v306, %v323
      %v325 = vlog2.pop %v319
      %v326 = vmul.f32 %v325, 0.6931472
      %v327 = vsub.f32 %v326, -2.0794415
      %v328 = vmul.f32 %v327, 0.5
      %v329 = vadd.f32 %v307, %v328
      %v330 = vsel %vm183, %v324, 0.0
      %331 = vadd.xlane.f32.xlu0 %v330
      %v332 = vpop.xlane.xlu0 %331
      %v333 = vrot.slane %v332, 4
      %v334 = vadd.f32 %v332, %v333
      %v335 = vrot.slane %v334, 2
      %v336 = vadd.f32 %v334, %v335
      %v337 = vrot.slane %v336, 1
      %v338 = vadd.f32 %v336, %v337
      %s339 = vtos %v338
      %v340 = vstv %s339
      %v341 = vmul.f32 %v340, 0.125
      %v342 = vsel %vm185, %v329, 0.0
      %343 = vadd.xlane.f32.xlu0 %v342
      %v344 = vpop.xlane.xlu0 %343
      %v345 = vrot.slane %v344, 4
      %v346 = vadd.f32 %v344, %v345
      %v347 = vrot.slane %v346, 2
      %v348 = vadd.f32 %v346, %v347
      %v349 = vrot.slane %v348, 1
      %v350 = vadd.f32 %v348, %v349
      %s351 = vtos %v350
      %v352 = vstv %s351
      %v353 = vmul.f32 %v352, 0.125
      %v354 = vrcp.pop %v318
      %v355 = vmul.f32 1.0, %v354
      %v356 = vmul.f32 %v305, %v355
      %v357 = vrcp.pop %v319
      %v358 = vmul.f32 1.0, %v357
      %v360 = vlaneseq
      %v361 = vshrl.u32 %v360, 7
      %v362 = vsub.s32 0, %v361
      %v363 = vrot.slane %v358, %v362
      %v365 = vmul.f32 %v356, %v363
      %v366 = vsel %vm189, %v365, 0.0
      %367 = vadd.xlane.f32.xlu0 %v366
      %v368 = vpop.xlane.xlu0 %367
      %v369 = vrot.slane %v368, 4
      %v370 = vadd.f32 %v368, %v369
      %v371 = vrot.slane %v370, 2
      %v372 = vadd.f32 %v370, %v371
      %v373 = vrot.slane %v372, 1
      %v374 = vadd.f32 %v372, %v373
      %s375 = vtos %v374
      %v376 = vstv %s375
      %v377 = vmul.f32 %v376, 0.0078125
      %v378 = vadd.f32 %v341, %v353
      %v379 = vadd.f32 %v378, %v377
      %v380 = vsub.f32 0.0, %v379
      %vm381 = vcmask 0
      %382 = vst.msk [vmem:[%s153] sm:$0x1] %vm381, %v380
      %p383 = scmp.lt.s32.totalorder %s13, 1
      %s384 = scalar_select %p383, %s13, 1
      %s385 = scalar_lea.vmem %s2, %s384
      // Predicated region
      $region44: #{tpu_custom_call.1} parent=27 // pred_check
        %p386 = pneg %p83
      $region45: #{tpu_custom_call.1} parent=27 // pred_check_branch
        %388 = sbr.rel (%p386) target = $region47
      $region46: #{tpu_custom_call.1} parent=27 // pred_region
        _
      $region47: #{tpu_custom_call.1} parent=27 // pred_fallthru
        _
    $region28: #{tpu_custom_call.1} parent=5 // pred_fallthru
      _
    %p389 = scmp.le.s32.totalorder 2, %s8
    // Predicated region
    $region48: #{tpu_custom_call.1} parent=5 // pred_check
      %p390 = pneg %p389
    $region49: #{tpu_custom_call.1} parent=5 // pred_check_branch
      %392 = sbr.rel (%p390) target = $region51
    $region50: #{tpu_custom_call.1} parent=5 // pred_region
      %s393 = ssub.s32 %s8, 2
      // Predicated region
      $region52: #{tpu_custom_call.1} parent=50 // pred_check
        %p394 = pneg %p89
      $region53: #{tpu_custom_call.1} parent=50 // pred_check_branch
        %396 = sbr.rel (%p394) target = $region55
      $region54: #{tpu_custom_call.1} parent=50 // pred_region
        %p397 = scmp.lt.s32.totalorder %s14, 1
        %s398 = scalar_select %p397, %s14, 1
        %s399 = scalar_lea.vmem %s2, %s398
      $region55: #{tpu_custom_call.1} parent=50 // pred_fallthru
        _
    $region51: #{tpu_custom_call.1} parent=5 // pred_fallthru
      _
  $region6: #{tpu_custom_call.1} parent=0 // loop_footer
    %s12 = sadd.s32 1, %s8
  $region7: #{tpu_custom_call.1} parent=0 // loop_footer_branch
    %7 = sbr.rel target = $region3
  $region8: #{tpu_custom_call.1} parent=0 // loop_exit
    _

</llo_original>
